<compile_context>
chip_gen: v7x
topology: tpu7x:2x2x1
jax: 0.10.0
libtpu: 0.0.40
codegen_flags: <defaults>
</compile_context>

<pallas_src>
import functools

import jax
import jax.numpy as jnp
import numpy as np
from jax.experimental import pallas as pl
from jax.experimental.pallas import tpu as pltpu


def _round_up(v, m):
    return (v + m - 1) // m * m


def _choose_tiling(nq, S, D, target_bytes):
    """Pick (nq_pad, tq): tq tuples per grid step, multiple of 8, divides nq_pad."""
    nq_pad = _round_up(max(nq, 1), 8)
    bytes_per_tuple = S * D * 4
    cap = max(8, (target_bytes // bytes_per_tuple) // 8 * 8)
    tq = min(cap, nq_pad)
    while nq_pad % tq != 0:
        tq -= 8
    return nq_pad, int(tq)
    # NOTE: for very large S*D (tuple slab > a few MiB) a second grid axis over
    # S (with partial-distance accumulation) would be needed; not required for
    # typical cirtorch shapes.


# ----------------------------- kernels -------------------------------------


def _pair_losses_tile(xt_ref, wp_ref, wn_ref, *, margin, eps):
    """Per-(tuple, slot) contrastive loss for one block.

    xt_ref : (TQ, S, D)  TQ tuples, S columns each, embedding dim D on lanes
    wp_ref : (TQ, S)     0.5*label       (0 for the query slot / padding)
    wn_ref : (TQ, S)     0.5*(1-label)   (0 for the query slot / padding)
    returns (TQ, S) float32 per-pair losses (query slot / padding -> 0).
    """
    xt = xt_ref[...]                          # (TQ, S, D)
    q = xt[:, 0:1, :]                         # (TQ, 1, D)  query row (bcast over S)
    dif = (q - xt) + eps                      # (TQ, S, D)  VPU
    d2 = jnp.sum(dif * dif, axis=-1)          # (TQ, S)     lane reduce
    dist = jnp.sqrt(d2)                       # EUP
    dist2 = dist * dist                       # mirrors torch.pow(D, 2)
    hinge = jnp.maximum(margin - dist, 0.0)
    return wp_ref[...] * dist2 + wn_ref[...] * (hinge * hinge)


def _vec_kernel(xt_ref, wp_ref, wn_ref, y_ref, *, margin, eps):
    y_ref[...] = _pair_losses_tile(xt_ref, wp_ref, wn_ref, margin=margin, eps=eps)


def _sum_kernel(xt_ref, wp_ref, wn_ref, out_ref, *, margin, eps):
    @pl.when(pl.program_id(0) == 0)
    def _init():
        out_ref[...] = jnp.zeros_like(out_ref)

    y = _pair_losses_tile(xt_ref, wp_ref, wn_ref, margin=margin, eps=eps)  # (TQ,S)
    part = jnp.sum(y, axis=1, keepdims=True)       # (TQ, 1)
    part = jnp.sum(part, axis=0, keepdims=True)    # (1, 1)
    out_ref[...] = out_ref[...] + part


# --------------------------- pallas wrapper ---------------------------------


def _contrastive_pallas(xt, wp, wn, *, margin, eps, tq, reduce):
    nq_pad, S, D = xt.shape
    grid = (nq_pad // tq,)
    in_specs = [
        pl.BlockSpec((tq, S, D), lambda i: (i, 0, 0)),  # tuple slabs (contiguous DMA)
        pl.BlockSpec((tq, S), lambda i: (i, 0)),        # wp
        pl.BlockSpec((tq, S), lambda i: (i, 0)),        # wn
    ]
    if reduce:
        kernel = functools.partial(_sum_kernel, margin=margin, eps=eps)
        out_shape = jax.ShapeDtypeStruct((1, 1), jnp.float32)
        out_specs = pl.BlockSpec((1, 1), lambda i: (0, 0))
        semantics = ("arbitrary",)          # resident scalar accumulator
    else:
        kernel = functools.partial(_vec_kernel, margin=margin, eps=eps)
        out_shape = jax.ShapeDtypeStruct((nq_pad, S), jnp.float32)
        out_specs = pl.BlockSpec((tq, S), lambda i: (i, 0))
        semantics = ("parallel",)           # independent blocks (megacore-friendly)

    return pl.pallas_call(
        kernel,
        out_shape=out_shape,
        grid_spec=pltpu.PrefetchScalarGridSpec(
            num_scalar_prefetch=0,
            grid=grid,
            in_specs=in_specs,
            out_specs=out_specs,
        ),
        compiler_params=pltpu.CompilerParams(
            dimension_semantics=semantics,
            vmem_limit_bytes=32 * 1024 * 1024,
        ),
    )(xt, wp, wn)


# ------------------------------ module --------------------------------------


class ContrastiveLoss:
    """JAX/Pallas port of the PyTorch ContrastiveLoss module."""

    def __init__(self, margin=0.7, pos_num=3, neg_num_for_loss=180, eps=1e-6,
                 tile_target_bytes=4 * 1024 * 1024):
        self.margin = float(margin)
        self.pos_num = pos_num                    # carried, see TODO at top
        self.neg_num_for_loss = neg_num_for_loss  # carried, see TODO at top
        self.eps = float(eps)
        self.tile_target_bytes = int(tile_target_bytes)

    def __call__(self, x, label, reduce=True):
        # ---- host-side glue (static shapes / label inspection) ----
        x = jnp.asarray(x, jnp.float32)
        label_np = np.asarray(label)
        D, N = x.shape
        nq = int(np.sum(label_np == -1))          # number of tuples
        if nq <= 0 or N % nq != 0:
            raise ValueError("label layout must be [q, p, n, ...] * nq")
        S = N // nq                               # images per tuple
        lab2 = label_np.reshape(nq, S).astype(np.float32)
        if not np.all(lab2[:, 0] == -1):
            raise ValueError("each tuple must start with its query column (label -1)")

        nq_pad, tq = _choose_tiling(nq, S, D, self.tile_target_bytes)

        # (D, N) -> (nq, S, D): tuple-major, embedding dim on lanes.  This one
        # layout transform replaces the previous jnp.repeat(query-columns) +
        # gather(non-query-columns) full-size HBM copies.
        xt = jnp.transpose(x.reshape(D, nq, S), (1, 2, 0))   # (nq, S, D)
        if nq_pad != nq:
            xt = jnp.pad(xt, ((0, nq_pad - nq), (0, 0), (0, 0)))

        # Per-(tuple, slot) weights; query slot and padded tuples are zeroed so
        # they contribute exactly 0 inside the kernel.
        wp = np.zeros((nq_pad, S), np.float32)
        wn = np.zeros((nq_pad, S), np.float32)
        wp[:nq] = 0.5 * lab2
        wn[:nq] = 0.5 * (1.0 - lab2)
        wp[:nq, 0] = 0.0
        wn[:nq, 0] = 0.0
        wp = jnp.asarray(wp)
        wn = jnp.asarray(wn)

        out = _contrastive_pallas(xt, wp, wn, margin=self.margin, eps=self.eps,
                                  tq=tq, reduce=reduce)
        if reduce:
            return out[0, 0]
        # (nq_pad, S) -> per-pair vector in original non-query column order
        return out[:nq, 1:].reshape(-1)

    def __repr__(self):
        return self.__class__.__name__ + "(margin={:.4f})".format(self.margin)


# ----------------------------- reference ------------------------------------


def _reference_loss(x, label, margin, eps, reduce=True):
    """Pure-JAX reference (mirrors the cirtorch PyTorch functional)."""
    x = jnp.asarray(x, jnp.float32)
    label_np = np.asarray(label)
    D, N = x.shape
    nq = int(np.sum(label_np == -1))
    S = N // nq
    xq = x[:, ::S]
    x1 = jnp.repeat(xq, S - 1, axis=1)
    idx = np.array([i for i in range(N) if label_np[i] != -1], dtype=np.int32)
    x2 = x[:, idx]
    lbl = jnp.asarray(label_np[idx], jnp.float32)
    dif = x1 - x2
    dist = jnp.sqrt(jnp.sum((dif + eps) ** 2, axis=0))
    y = 0.5 * lbl * dist ** 2 + 0.5 * (1 - lbl) * jnp.maximum(margin - dist, 0) ** 2
    return jnp.sum(y) if reduce else y


if __name__ == "__main__":
    # Case 1: the module docstring example — dim 128, 5 tuples of (q, p, n1..n5).
    label1 = np.array([-1, 1, 0, 0, 0, 0, 0] * 5, dtype=np.float32)       # (35,)
    x1 = jax.random.normal(jax.random.PRNGKey(0), (128, label1.shape[0]),
                           dtype=jnp.float32)
    mod1 = ContrastiveLoss(margin=0.7)

    # Case 2: more tuples + a tiny tile target so the kernel runs a multi-step
    # grid (exercises the pipelined "parallel" path and the accumulating sum).
    label2 = np.array([-1, 1, 1, 0, 0, 0, 0, 0] * 20, dtype=np.float32)   # nq=20, S=8
    x2 = jax.random.normal(jax.random.PRNGKey(1), (96, label2.shape[0]),
                           dtype=jnp.float32)
    mod2 = ContrastiveLoss(margin=0.7, tile_target_bytes=8 * 1024)

    for mod, xx, ll in [(mod1, x1, label1), (mod2, x2, label2)]:
        out_red = mod(xx, ll, reduce=True)
        out_vec = mod(xx, ll, reduce=False)
        jax.block_until_ready(out_red)
        jax.block_until_ready(out_vec)

        ref_red = _reference_loss(xx, ll, mod.margin, mod.eps, reduce=True)
        ref_vec = _reference_loss(xx, ll, mod.margin, mod.eps, reduce=False)

        np.testing.assert_allclose(np.asarray(out_red), np.asarray(ref_red),
                                   rtol=1e-4, atol=1e-5)
        np.testing.assert_allclose(np.asarray(out_vec), np.asarray(ref_vec),
                                   rtol=1e-4, atol=1e-5)

    print("KERNEL_OK")
</pallas_src>

<mosaic_0001>
module attributes {stable_mosaic.version = 11 : i64} {
  func.func @_sum_kernel(%arg0: i32, %arg1: memref<8x7x128xf32, #tpu.memory_space<vmem>>, %arg2: memref<8x7xf32, #tpu.memory_space<vmem>>, %arg3: memref<8x7xf32, #tpu.memory_space<vmem>>, %arg4: memref<1x1xf32, #tpu.memory_space<vmem>>) attributes {dimension_semantics = [#tpu.dimension_semantics<arbitrary>], iteration_bounds = array<i64: 1>, scalar_prefetch = 0 : i64, scratch_operands = 0 : i64, tpu.core_type = #tpu.core_type<tc>, window_params = [{transform_indices = @transform_0, window_bounds = array<i64: 8, 7, 128>}, {transform_indices = @transform_1, window_bounds = array<i64: 8, 7>}, {transform_indices = @transform_2, window_bounds = array<i64: 8, 7>}, {pipeline_mode = #tpu.pipeline_mode<synchronous>, transform_indices = @transform_3, window_bounds = array<i64: 1, 1>}]} {
    %c0_i32 = arith.constant 0 : i32
    %0 = arith.cmpi eq, %arg0, %c0_i32 : i32
    %1 = arith.extui %0 : i1 to i32
    %c0_i32_0 = arith.constant 0 : i32
    %2 = arith.cmpi ne, %1, %c0_i32_0 : i32
    scf.if %2 {
      %cst_16 = arith.constant 0.000000e+00 : f32
      %30 = vector.broadcast %cst_16 : f32 to vector<1x1xf32>
      %c0_17 = arith.constant 0 : index
      %c0_18 = arith.constant 0 : index
      %31 = vector.load %arg4[%c0_17, %c0_18] : memref<1x1xf32, #tpu.memory_space<vmem>>, vector<1x1xf32>
      tpu.vector_store %arg4[%c0_17, %c0_18], %30 {strides = array<i32>} : memref<1x1xf32, #tpu.memory_space<vmem>>, vector<1x1xf32>,
    } else {
    }
    %c0 = arith.constant 0 : index
    %c0_1 = arith.constant 0 : index
    %c0_2 = arith.constant 0 : index
    %3 = vector.load %arg1[%c0, %c0_1, %c0_2] : memref<8x7x128xf32, #tpu.memory_space<vmem>>, vector<8x7x128xf32>
    %4 = vector.extract_strided_slice %3 {offsets = [0, 0, 0], sizes = [8, 1, 128], strides = [1, 1, 1]} : vector<8x7x128xf32> to vector<8x1x128xf32>
    %5 = vector.broadcast %4 : vector<8x1x128xf32> to vector<8x7x128xf32>
    %6 = arith.subf %5, %3 : vector<8x7x128xf32>
    %cst = arith.constant 9.99999997E-7 : f32
    %7 = vector.broadcast %cst : f32 to vector<8x7x128xf32>
    %8 = arith.addf %6, %7 : vector<8x7x128xf32>
    %9 = arith.mulf %8, %8 : vector<8x7x128xf32>
    %cst_3 = arith.constant dense<0.000000e+00> : vector<8x7xf32>
    %10 = vector.multi_reduction <add>, %9, %cst_3 [2] : vector<8x7x128xf32> to vector<8x7xf32>
    %11 = math.sqrt %10 : vector<8x7xf32>
    %12 = arith.mulf %11, %11 : vector<8x7xf32>
    %cst_4 = arith.constant 0.699999988 : f32
    %13 = vector.broadcast %cst_4 : f32 to vector<8x7xf32>
    %14 = arith.subf %13, %11 : vector<8x7xf32>
    %cst_5 = arith.constant 0.000000e+00 : f32
    %15 = vector.broadcast %cst_5 : f32 to vector<8x7xf32>
    %16 = arith.maximumf %14, %15 : vector<8x7xf32>
    %c0_6 = arith.constant 0 : index
    %c0_7 = arith.constant 0 : index
    %17 = vector.load %arg2[%c0_6, %c0_7] : memref<8x7xf32, #tpu.memory_space<vmem>>, vector<8x7xf32>
    %18 = arith.mulf %17, %12 : vector<8x7xf32>
    %c0_8 = arith.constant 0 : index
    %c0_9 = arith.constant 0 : index
    %19 = vector.load %arg3[%c0_8, %c0_9] : memref<8x7xf32, #tpu.memory_space<vmem>>, vector<8x7xf32>
    %20 = arith.mulf %16, %16 : vector<8x7xf32>
    %21 = arith.mulf %19, %20 : vector<8x7xf32>
    %22 = arith.addf %18, %21 : vector<8x7xf32>
    %cst_10 = arith.constant dense<0.000000e+00> : vector<8xf32>
    %23 = vector.multi_reduction <add>, %22, %cst_10 [1] : vector<8x7xf32> to vector<8xf32>
    %24 = vector.shape_cast %23 : vector<8xf32> to vector<8x1xf32>
    %cst_11 = arith.constant dense<0.000000e+00> : vector<1xf32>
    %25 = vector.multi_reduction <add>, %24, %cst_11 [0] : vector<8x1xf32> to vector<1xf32>
    %26 = vector.shape_cast %25 : vector<1xf32> to vector<1x1xf32>
    %c0_12 = arith.constant 0 : index
    %c0_13 = arith.constant 0 : index
    %27 = vector.load %arg4[%c0_12, %c0_13] : memref<1x1xf32, #tpu.memory_space<vmem>>, vector<1x1xf32>
    %28 = arith.addf %27, %26 : vector<1x1xf32>
    %c0_14 = arith.constant 0 : index
    %c0_15 = arith.constant 0 : index
    %29 = vector.load %arg4[%c0_14, %c0_15] : memref<1x1xf32, #tpu.memory_space<vmem>>, vector<1x1xf32>
    tpu.vector_store %arg4[%c0_14, %c0_15], %28 {strides = array<i32>} : memref<1x1xf32, #tpu.memory_space<vmem>>, vector<1x1xf32>,
    return
  }
  func.func @transform_0(%arg0: i32) -> (i32, i32, i32) {
    %c0_i32 = arith.constant 0 : i32
    %c0_i32_0 = arith.constant 0 : i32
    %c0_i32_1 = arith.constant 0 : i32
    return %arg0, %c0_i32, %c0_i32_0 : i32, i32, i32
  }
  func.func @transform_1(%arg0: i32) -> (i32, i32) {
    %c0_i32 = arith.constant 0 : i32
    %c0_i32_0 = arith.constant 0 : i32
    return %arg0, %c0_i32 : i32, i32
  }
  func.func @transform_2(%arg0: i32) -> (i32, i32) {
    %c0_i32 = arith.constant 0 : i32
    %c0_i32_0 = arith.constant 0 : i32
    return %arg0, %c0_i32 : i32, i32
  }
  func.func @transform_3(%arg0: i32) -> (i32, i32) {
    %c0_i32 = arith.constant 0 : i32
    %c0_i32_0 = arith.constant 0 : i32
    %c0_i32_1 = arith.constant 0 : i32
    return %c0_i32, %c0_i32_0 : i32, i32
  }
}

</mosaic_0001>

<llo_original>
// kernel: tpu_custom_call.1
$region0: #{tpu_custom_call.1}
  #allocation0 [shape = 'u32[]', space=smem, size = 0x4, offset = 0x4, fixed_abs, tag = 'smem constant byte address 0x4 - core index']
  #allocation1 [shape = 'u32[144,128]{1,0:T(1,128)}', space=vmem, size = 0x12000, scoped, tag = 'internal scratch']
  %s0 = inlined_call_operand.vmem [shape: f32[8,7,128], index: 0, kind: input, shape index: {}]
  %s1 = inlined_call_operand.vmem [shape: f32[8,7], index: 1, kind: input, shape index: {}]
  %s2 = inlined_call_operand.vmem [shape: f32[8,7], index: 2, kind: input, shape index: {}]
  %s3 = inlined_call_operand.hbm [shape: f32[1,1], index: 3, kind: output, shape index: {}]
  %s4 = sld [smem:[#allocation0]]
  $region26: #{tpu_custom_call.1} parent=0
    _
  %s6 = ssub.s32 1, %s4
  %s7 = scalar_select 0, %s6, %s4
  $region1: #{tpu_custom_call.1} parent=0
    #allocation2 [shape = 'u8[512]{0}', space=vmem, size = 0x400, scoped, tag = 'output window, operand 0, single buffered']
    #allocation3 [shape = 's32[1]{0}', space=sflag, size = 0x4, scoped, tag = 'scoped memory for tpu_custom_call.1']
    %8 = vsyncpa [#allocation3], 0
    // Predicated region
    $region2: #{tpu_custom_call.1} parent=1 // pred_check
      _
    $region3: #{tpu_custom_call.1} parent=1 // pred_check_branch
      %10 = sbr.rel (0) target = $region5
    $region4: #{tpu_custom_call.1} parent=1 // pred_region
      _
    $region5: #{tpu_custom_call.1} parent=1 // pred_fallthru
      _
    // Predicated region
    $region6: #{tpu_custom_call.1} parent=1 // pred_check
      _
    $region7: #{tpu_custom_call.1} parent=1 // pred_check_branch
      %12 = sbr.rel (0) target = $region9
    $region8: #{tpu_custom_call.1} parent=1 // pred_region
      _
    $region9: #{tpu_custom_call.1} parent=1 // pred_fallthru
      _
    // Predicated region
    $region10: #{tpu_custom_call.1} parent=1 // pred_check
      _
    $region11: #{tpu_custom_call.1} parent=1 // pred_check_branch
      %14 = sbr.rel (0) target = $region13
    $region12: #{tpu_custom_call.1} parent=1 // pred_region
      _
    $region13: #{tpu_custom_call.1} parent=1 // pred_fallthru
      _
    %p15 = scmp.eq.s32.totalorder 0, 0
    // Predicated region
    $region14: #{tpu_custom_call.1} parent=1 // pred_check
      %p16 = pneg %p15
    $region15: #{tpu_custom_call.1} parent=1 // pred_check_branch
      %18 = sbr.rel (%p16) target = $region17
    $region16: #{tpu_custom_call.1} parent=1 // pred_region
      %vm19 = vcmask 0
      %20 = vst.msk [vmem:[#allocation2] sm:$0x1] %vm19, 0.0
    $region17: #{tpu_custom_call.1} parent=1 // pred_fallthru
      _
    %v21 = vld [vmem:[%s0] sm:$0x7f]
    %v22 = vld [vmem:[%s0 + $0x8] sm:$0x7f]
    %v23 = vld [vmem:[%s0 + $0x10] sm:$0x7f]
    %v24 = vld [vmem:[%s0 + $0x18] sm:$0x7f]
    %v25 = vld [vmem:[%s0 + $0x20] sm:$0x7f]
    %v26 = vld [vmem:[%s0 + $0x28] sm:$0x7f]
    %v27 = vld [vmem:[%s0 + $0x30] sm:$0x7f]
    %v28 = vld [vmem:[%s0 + $0x38] sm:$0x7f]
    %v29 = vlaneseq
    %v30 = vshrl.u32 %v29, 7
    %v31 = vsub.s32 0, %v30
    %v32 = vrot.slane %v21, %v31
    %v33 = vlaneseq
    %v34 = vshrl.u32 %v33, 7
    %v35 = vsub.s32 0, %v34
    %v36 = vrot.slane %v22, %v35
    %v37 = vlaneseq
    %v38 = vshrl.u32 %v37, 7
    %v39 = vsub.s32 0, %v38
    %v40 = vrot.slane %v23, %v39
    %v41 = vlaneseq
    %v42 = vshrl.u32 %v41, 7
    %v43 = vsub.s32 0, %v42
    %v44 = vrot.slane %v24, %v43
    %v45 = vlaneseq
    %v46 = vshrl.u32 %v45, 7
    %v47 = vsub.s32 0, %v46
    %v48 = vrot.slane %v25, %v47
    %v49 = vlaneseq
    %v50 = vshrl.u32 %v49, 7
    %v51 = vsub.s32 0, %v50
    %v52 = vrot.slane %v26, %v51
    %v53 = vlaneseq
    %v54 = vshrl.u32 %v53, 7
    %v55 = vsub.s32 0, %v54
    %v56 = vrot.slane %v27, %v55
    %v57 = vlaneseq
    %v58 = vshrl.u32 %v57, 7
    %v59 = vsub.s32 0, %v58
    %v60 = vrot.slane %v28, %v59
    %v61 = vsub.f32 %v32, %v21
    %v62 = vsub.f32 %v36, %v22
    %v63 = vsub.f32 %v40, %v23
    %v64 = vsub.f32 %v44, %v24
    %v65 = vsub.f32 %v48, %v25
    %v66 = vsub.f32 %v52, %v26
    %v67 = vsub.f32 %v56, %v27
    %v68 = vsub.f32 %v60, %v28
    %v69 = vadd.f32 %v61, 1e-06
    %v70 = vadd.f32 %v62, 1e-06
    %v71 = vadd.f32 %v63, 1e-06
    %v72 = vadd.f32 %v64, 1e-06
    %v73 = vadd.f32 %v65, 1e-06
    %v74 = vadd.f32 %v66, 1e-06
    %v75 = vadd.f32 %v67, 1e-06
    %v76 = vadd.f32 %v68, 1e-06
    %v77 = vmul.f32 %v69, %v69
    %v78 = vmul.f32 %v70, %v70
    %v79 = vmul.f32 %v71, %v71
    %v80 = vmul.f32 %v72, %v72
    %v81 = vmul.f32 %v73, %v73
    %v82 = vmul.f32 %v74, %v74
    %v83 = vmul.f32 %v75, %v75
    %v84 = vmul.f32 %v76, %v76
    %vm85 = vcmask 1046528
    %v86 = vsel %vm85, %v77, 0.0
    %87 = vadd.xlane.f32.xlu0 %v86
    %v88 = vpop.xlane.xlu0 %87
    %v89 = vsel %vm85, %v78, 0.0
    %90 = vadd.xlane.f32.xlu0 %v89
    %v91 = vpop.xlane.xlu0 %90
    %v92 = vsel %vm85, %v79, 0.0
    %93 = vadd.xlane.f32.xlu0 %v92
    %v94 = vpop.xlane.xlu0 %93
    %v95 = vsel %vm85, %v80, 0.0
    %96 = vadd.xlane.f32.xlu0 %v95
    %v97 = vpop.xlane.xlu0 %96
    %v98 = vsel %vm85, %v81, 0.0
    %99 = vadd.xlane.f32.xlu0 %v98
    %v100 = vpop.xlane.xlu0 %99
    %v101 = vsel %vm85, %v82, 0.0
    %102 = vadd.xlane.f32.xlu0 %v101
    %v103 = vpop.xlane.xlu0 %102
    %v104 = vsel %vm85, %v83, 0.0
    %105 = vadd.xlane.f32.xlu0 %v104
    %v106 = vpop.xlane.xlu0 %105
    %v107 = vsel %vm85, %v84, 0.0
    %108 = vadd.xlane.f32.xlu0 %v107
    %v109 = vpop.xlane.xlu0 %108
    %v110 = vrsqrt.pop %v88
    %v111 = vmul.f32 %v88, %v110
    %vm112 = vcmp.eq.f32.partialorder %v88, inf
    %v113 = vsel %vm112, %v88, %v111
    %vm114 = vcmp.eq.f32.partialorder %v88, 0.0
    %v115 = vand.u32 %v88, 2147483648
    %v116 = vsel %vm114, %v115, %v113
    %v117 = vrsqrt.pop %v91
    %v118 = vmul.f32 %v91, %v117
    %vm119 = vcmp.eq.f32.partialorder %v91, inf
    %v120 = vsel %vm119, %v91, %v118
    %vm121 = vcmp.eq.f32.partialorder %v91, 0.0
    %v122 = vand.u32 %v91, 2147483648
    %v123 = vsel %vm121, %v122, %v120
    %v124 = vrsqrt.pop %v94
    %v125 = vmul.f32 %v94, %v124
    %vm126 = vcmp.eq.f32.partialorder %v94, inf
    %v127 = vsel %vm126, %v94, %v125
    %vm128 = vcmp.eq.f32.partialorder %v94, 0.0
    %v129 = vand.u32 %v94, 2147483648
    %v130 = vsel %vm128, %v129, %v127
    %v131 = vrsqrt.pop %v97
    %v132 = vmul.f32 %v97, %v131
    %vm133 = vcmp.eq.f32.partialorder %v97, inf
    %v134 = vsel %vm133, %v97, %v132
    %vm135 = vcmp.eq.f32.partialorder %v97, 0.0
    %v136 = vand.u32 %v97, 2147483648
    %v137 = vsel %vm135, %v136, %v134
    %v138 = vrsqrt.pop %v100
    %v139 = vmul.f32 %v100, %v138
    %vm140 = vcmp.eq.f32.partialorder %v100, inf
    %v141 = vsel %vm140, %v100, %v139
    %vm142 = vcmp.eq.f32.partialorder %v100, 0.0
    %v143 = vand.u32 %v100, 2147483648
    %v144 = vsel %vm142, %v143, %v141
    %v145 = vrsqrt.pop %v103
    %v146 = vmul.f32 %v103, %v145
    %vm147 = vcmp.eq.f32.partialorder %v103, inf
    %v148 = vsel %vm147, %v103, %v146
    %vm149 = vcmp.eq.f32.partialorder %v103, 0.0
    %v150 = vand.u32 %v103, 2147483648
    %v151 = vsel %vm149, %v150, %v148
    %v152 = vrsqrt.pop %v106
    %v153 = vmul.f32 %v106, %v152
    %vm154 = vcmp.eq.f32.partialorder %v106, inf
    %v155 = vsel %vm154, %v106, %v153
    %vm156 = vcmp.eq.f32.partialorder %v106, 0.0
    %v157 = vand.u32 %v106, 2147483648
    %v158 = vsel %vm156, %v157, %v155
    %v159 = vrsqrt.pop %v109
    %v160 = vmul.f32 %v109, %v159
    %vm161 = vcmp.eq.f32.partialorder %v109, inf
    %v162 = vsel %vm161, %v109, %v160
    %vm163 = vcmp.eq.f32.partialorder %v109, 0.0
    %v164 = vand.u32 %v109, 2147483648
    %v165 = vsel %vm163, %v164, %v162
    %v166 = vmul.f32 %v116, %v116
    %v167 = vmul.f32 %v123, %v123
    %v168 = vmul.f32 %v130, %v130
    %v169 = vmul.f32 %v137, %v137
    %v170 = vmul.f32 %v144, %v144
    %v171 = vmul.f32 %v151, %v151
    %v172 = vmul.f32 %v158, %v158
    %v173 = vmul.f32 %v165, %v165
    %v174 = vsub.f32 0.7, %v116
    %v175 = vsub.f32 0.7, %v123
    %v176 = vsub.f32 0.7, %v130
    %v177 = vsub.f32 0.7, %v137
    %v178 = vsub.f32 0.7, %v144
    %v179 = vsub.f32 0.7, %v151
    %v180 = vsub.f32 0.7, %v158
    %v181 = vsub.f32 0.7, %v165
    %v182 = vmax.f32 %v174, 0.0
    %v183 = vmax.f32 %v175, 0.0
    %v184 = vmax.f32 %v176, 0.0
    %v185 = vmax.f32 %v177, 0.0
    %v186 = vmax.f32 %v178, 0.0
    %v187 = vmax.f32 %v179, 0.0
    %v188 = vmax.f32 %v180, 0.0
    %v189 = vmax.f32 %v181, 0.0
    %v190 = vld [vmem:[%s1] sm:$0xff]
    %v199 = vlaneseq
    %v200 = vand.u32 %v199, 127
    %v201 = vlaneseq
    %v202 = vshrl.u32 %v201, 7
    %v203 = vsub.s32 %v200, %v202
    %v204 = vrot.slane %v166, %v203
    %v205 = vlaneseq
    %v206 = vshrl.u32 %v205, 7
    %v207 = vsub.s32 %v200, %v206
    %v208 = vrot.slane %v167, %v207
    %v209 = vlaneseq
    %v210 = vshrl.u32 %v209, 7
    %v211 = vsub.s32 %v200, %v210
    %v212 = vrot.slane %v168, %v211
    %v213 = vlaneseq
    %v214 = vshrl.u32 %v213, 7
    %v215 = vsub.s32 %v200, %v214
    %v216 = vrot.slane %v169, %v215
    %v217 = vlaneseq
    %v218 = vshrl.u32 %v217, 7
    %v219 = vsub.s32 %v200, %v218
    %v220 = vrot.slane %v170, %v219
    %v221 = vlaneseq
    %v222 = vshrl.u32 %v221, 7
    %v223 = vsub.s32 %v200, %v222
    %v224 = vrot.slane %v171, %v223
    %v225 = vlaneseq
    %v226 = vshrl.u32 %v225, 7
    %v227 = vsub.s32 %v200, %v226
    %v228 = vrot.slane %v172, %v227
    %v229 = vlaneseq
    %v230 = vshrl.u32 %v229, 7
    %v231 = vsub.s32 %v200, %v230
    %v232 = vrot.slane %v173, %v231
    %vm233 = vcmask 1041409
    %v234 = vsel %vm233, %v208, %v204
    %vm235 = vcmask 1042434
    %v236 = vsel %vm235, %v212, %v234
    %vm237 = vcmask 1043459
    %v238 = vsel %vm237, %v216, %v236
    %vm239 = vcmask 1044484
    %v240 = vsel %vm239, %v220, %v238
    %vm241 = vcmask 1045509
    %v242 = vsel %vm241, %v224, %v240
    %vm243 = vcmask 1046534
    %v244 = vsel %vm243, %v228, %v242
    %vm245 = vcmask 1047559
    %v246 = vsel %vm245, %v232, %v244
    %v248 = vmul.f32 %v190, %v246
    %v249 = vld [vmem:[%s2] sm:$0xff]
    %v250 = vmul.f32 %v182, %v182
    %v251 = vmul.f32 %v183, %v183
    %v252 = vmul.f32 %v184, %v184
    %v253 = vmul.f32 %v185, %v185
    %v254 = vmul.f32 %v186, %v186
    %v255 = vmul.f32 %v187, %v187
    %v256 = vmul.f32 %v188, %v188
    %v257 = vmul.f32 %v189, %v189
    %v266 = vlaneseq
    %v267 = vshrl.u32 %v266, 7
    %v268 = vsub.s32 %v200, %v267
    %v269 = vrot.slane %v250, %v268
    %v270 = vlaneseq
    %v271 = vshrl.u32 %v270, 7
    %v272 = vsub.s32 %v200, %v271
    %v273 = vrot.slane %v251, %v272
    %v274 = vlaneseq
    %v275 = vshrl.u32 %v274, 7
    %v276 = vsub.s32 %v200, %v275
    %v277 = vrot.slane %v252, %v276
    %v278 = vlaneseq
    %v279 = vshrl.u32 %v278, 7
    %v280 = vsub.s32 %v200, %v279
    %v281 = vrot.slane %v253, %v280
    %v282 = vlaneseq
    %v283 = vshrl.u32 %v282, 7
    %v284 = vsub.s32 %v200, %v283
    %v285 = vrot.slane %v254, %v284
    %v286 = vlaneseq
    %v287 = vshrl.u32 %v286, 7
    %v288 = vsub.s32 %v200, %v287
    %v289 = vrot.slane %v255, %v288
    %v290 = vlaneseq
    %v291 = vshrl.u32 %v290, 7
    %v292 = vsub.s32 %v200, %v291
    %v293 = vrot.slane %v256, %v292
    %v294 = vlaneseq
    %v295 = vshrl.u32 %v294, 7
    %v296 = vsub.s32 %v200, %v295
    %v297 = vrot.slane %v257, %v296
    %v298 = vsel %vm233, %v273, %v269
    %v299 = vsel %vm235, %v277, %v298
    %v300 = vsel %vm237, %v281, %v299
    %v301 = vsel %vm239, %v285, %v300
    %v302 = vsel %vm241, %v289, %v301
    %v303 = vsel %vm243, %v293, %v302
    %v304 = vsel %vm245, %v297, %v303
    %v306 = vmul.f32 %v249, %v304
    %v307 = vadd.f32 %v248, %v306
    %vm308 = vcmask 56320
    %v309 = vsel %vm308, %v307, 0.0
    %310 = vadd.xlane.f32.xlu0 %v309
    %v311 = vpop.xlane.xlu0 %310
    %v312 = vrot.slane %v311, 4
    %v313 = vadd.f32 %v311, %v312
    %v314 = vrot.slane %v313, 2
    %v315 = vadd.f32 %v313, %v314
    %v316 = vrot.slane %v315, 1
    %v317 = vadd.f32 %v315, %v316
    %v318 = vld [vmem:[#allocation2] sm:$0x1]
    %v319 = vadd.f32 %v318, %v317
    %vm320 = vcmask 0
    %321 = vst.msk [vmem:[#allocation2] sm:$0x1] %vm320, %v319
    // Predicated region
    $region18: #{tpu_custom_call.1} parent=1 // pred_check
      _
    $region19: #{tpu_custom_call.1} parent=1 // pred_check_branch
      %323 = sbr.rel (0) target = $region21
    $region20: #{tpu_custom_call.1} parent=1 // pred_region
      %s325 = ssub.s32 16, 16
      %326 = vsyncadd [#allocation3], %s325
      %s328 = sshll.u32 [#allocation2], 4
      %s329 = int_to_ptr.vmem [resolvable:$true] %s328
      %331 = dma.vmem_to_hbm [thread:$0]  %s329, 16, %s3, [#allocation3]
    $region21: #{tpu_custom_call.1} parent=1 // pred_fallthru
      _
    // Predicated region
    $region22: #{tpu_custom_call.1} parent=1 // pred_check
      _
    $region23: #{tpu_custom_call.1} parent=1 // pred_check_branch
      %333 = sbr.rel (0) target = $region25
    $region24: #{tpu_custom_call.1} parent=1 // pred_region
      %334 = dma.done [#allocation3], 16
    $region25: #{tpu_custom_call.1} parent=1 // pred_fallthru
      _
    %335 = vsyncpa [#allocation3], 1

</llo_original>
